<compile_context>
chip_gen: v7x
topology: tpu7x:2x2x1
jax: 0.10.0
libtpu: 0.0.40
codegen_flags: <defaults>
</compile_context>

<pallas_src>
import jax
import jax.numpy as jnp
from jax.experimental import pallas as pl
from jax.experimental.pallas import tpu as pltpu

OUT_RAW = 28 * 28      # 784
OUT_PAD = 7 * 128      # 896, lane-dense multiple of 128


def _round_up(n, m):
    return (n + m - 1) // m * m


def decoder_mnist_kernel(x_ref, w1_ref, b1_ref, w2_ref, b2_ref, w3_ref, b3_ref, o_ref):
    # Layer 1: Linear(dim -> 64) + ReLU  (bf16 MXU matmul, f32 accumulate)
    x = x_ref[...].astype(jnp.bfloat16)
    h1 = jnp.dot(x, w1_ref[...], preferred_element_type=jnp.float32)
    h1 = jnp.maximum(h1 + b1_ref[...], 0.0).astype(jnp.bfloat16)

    # Layer 2: Linear(64 -> 256) + ReLU
    h2 = jnp.dot(h1, w2_ref[...], preferred_element_type=jnp.float32)
    h2 = jnp.maximum(h2 + b2_ref[...], 0.0).astype(jnp.bfloat16)

    # Layer 3: Linear(256 -> 896 padded) + Sigmoid
    logits = jnp.dot(h2, w3_ref[...], preferred_element_type=jnp.float32)
    logits = logits + b3_ref[...]
    # sigmoid = 1 / (1 + exp(-z)); exp + approx reciprocal both run on the EUP slot.
    o_ref[...] = pl.reciprocal(1.0 + jnp.exp(-logits), approx=True)


def decoder_mnist_forward(x, params, *, block_b=512):
    """x: (B, dim) float32, params: f32 (w1,b1,w2,b2,w3,b3). Returns (B,1,28,28) f32."""
    w1, b1, w2, b2, w3, b3 = params
    B, dim = x.shape

    # Kernel-ready params: bf16 weights, f32 biases, layer-3 padded 784 -> 896.
    w1k = w1.astype(jnp.bfloat16)
    w2k = w2.astype(jnp.bfloat16)
    w3k = jnp.pad(w3, ((0, 0), (0, OUT_PAD - OUT_RAW))).astype(jnp.bfloat16)
    b3k = jnp.pad(b3, ((0, 0), (0, OUT_PAD - OUT_RAW)))

    # Batch tiling: TB capped so per-step VMEM (double-buffered x/out tiles plus
    # ~0.45 MB resident bf16 weights) fits comfortably even on v7x's smaller VMEM.
    TB = min(block_b, _round_up(B, 8))
    Bp = _round_up(B, TB)
    if Bp != B:
        x = jnp.pad(x, ((0, Bp - B), (0, 0)))
    grid = (Bp // TB,)

    cost = pl.CostEstimate(
        flops=2 * Bp * (dim * 64 + 64 * 256 + 256 * OUT_PAD),
        transcendentals=Bp * OUT_PAD,
        bytes_accessed=int(
            Bp * dim * 4                                   # x (f32)
            + 2 * (dim * 64 + 64 * 256 + 256 * OUT_PAD)    # bf16 weights
            + 4 * (64 + 256 + OUT_PAD)                     # f32 biases
            + Bp * OUT_PAD * 4                             # output (f32)
        ),
    )

    out_flat = pl.pallas_call(
        decoder_mnist_kernel,
        out_shape=jax.ShapeDtypeStruct((Bp, OUT_PAD), jnp.float32),
        grid_spec=pltpu.PrefetchScalarGridSpec(
            num_scalar_prefetch=0,
            grid=grid,
            in_specs=[
                pl.BlockSpec((TB, dim), lambda i: (i, 0)),        # x tile
                pl.BlockSpec((dim, 64), lambda i: (0, 0)),        # w1 (resident)
                pl.BlockSpec((1, 64), lambda i: (0, 0)),          # b1
                pl.BlockSpec((64, 256), lambda i: (0, 0)),        # w2
                pl.BlockSpec((1, 256), lambda i: (0, 0)),         # b2
                pl.BlockSpec((256, OUT_PAD), lambda i: (0, 0)),   # w3 (padded)
                pl.BlockSpec((1, OUT_PAD), lambda i: (0, 0)),     # b3 (padded)
            ],
            out_specs=pl.BlockSpec((TB, OUT_PAD), lambda i: (i, 0)),
        ),
        compiler_params=pltpu.CompilerParams(
            dimension_semantics=("parallel",),
        ),
        cost_estimate=cost,
    )(x, w1k, b1, w2k, b2, w3k, b3k)

    # Drop batch padding + lane padding, then PyTorch .view(-1, 1, 28, 28).
    return out_flat[:B, :OUT_RAW].reshape(-1, 1, 28, 28)


def init_decoder_params(key, dim):
    """Matches the PyTorch module init:
       - nn.Linear weights: xavier_uniform_ (bound = sqrt(6/(fan_in+fan_out)))
       - biases: 0.0
       Weights stored transposed (in, out) so the kernel computes x @ W."""
    sizes = [(dim, 64), (64, 256), (256, OUT_RAW)]
    params = []
    for fan_in, fan_out in sizes:
        key, sub = jax.random.split(key)
        bound = jnp.sqrt(6.0 / (fan_in + fan_out))
        w = jax.random.uniform(sub, (fan_in, fan_out), jnp.float32, -bound, bound)
        b = jnp.zeros((1, fan_out), jnp.float32)
        params.extend([w, b])
    return tuple(params)


def reference_forward(x, params):
    """Pure-JAX reference using the same mixed precision (bf16 operands, f32 acc)."""
    w1, b1, w2, b2, w3, b3 = params
    bf = jnp.bfloat16
    h1 = jnp.maximum(
        jnp.dot(x.astype(bf), w1.astype(bf), preferred_element_type=jnp.float32) + b1, 0.0)
    h2 = jnp.maximum(
        jnp.dot(h1.astype(bf), w2.astype(bf), preferred_element_type=jnp.float32) + b2, 0.0)
    logits = jnp.dot(h2.astype(bf), w3.astype(bf), preferred_element_type=jnp.float32) + b3
    return jax.nn.sigmoid(logits).reshape(-1, 1, 28, 28)


if __name__ == "__main__":
    key = jax.random.PRNGKey(0)
    dim = 32       # latent dimension of the decoder
    batch = 8      # small batch

    k_params, k_x = jax.random.split(key)
    params = init_decoder_params(k_params, dim)
    x = jax.random.normal(k_x, (batch, dim), jnp.float32)

    out = decoder_mnist_forward(x, params)
    out = jax.block_until_ready(out)

    assert out.shape == (batch, 1, 28, 28), out.shape
    ref = reference_forward(x, params)
    assert jnp.allclose(out, ref, atol=2e-3, rtol=2e-3), "mismatch vs reference"

    print("KERNEL_OK")
</pallas_src>

<mosaic_0001>
module attributes {stable_mosaic.version = 11 : i64} {
  func.func @decoder_mnist_kernel(%arg0: i32, %arg1: memref<8x32xf32, #tpu.memory_space<vmem>>, %arg2: memref<32x64xbf16, #tpu.memory_space<vmem>>, %arg3: memref<1x64xf32, #tpu.memory_space<vmem>>, %arg4: memref<64x256xbf16, #tpu.memory_space<vmem>>, %arg5: memref<1x256xf32, #tpu.memory_space<vmem>>, %arg6: memref<256x896xbf16, #tpu.memory_space<vmem>>, %arg7: memref<1x896xf32, #tpu.memory_space<vmem>>, %arg8: memref<8x896xf32, #tpu.memory_space<vmem>>) attributes {dimension_semantics = [#tpu.dimension_semantics<parallel>], iteration_bounds = array<i64: 1>, scalar_prefetch = 0 : i64, scratch_operands = 0 : i64, tpu.core_type = #tpu.core_type<tc>, window_params = [{transform_indices = @transform_0, window_bounds = array<i64: 8, 32>}, {pipeline_mode = #tpu.pipeline_mode<synchronous>, transform_indices = @transform_1, window_bounds = array<i64: 32, 64>}, {pipeline_mode = #tpu.pipeline_mode<synchronous>, transform_indices = @transform_2, window_bounds = array<i64: 1, 64>}, {pipeline_mode = #tpu.pipeline_mode<synchronous>, transform_indices = @transform_3, window_bounds = array<i64: 64, 256>}, {pipeline_mode = #tpu.pipeline_mode<synchronous>, transform_indices = @transform_4, window_bounds = array<i64: 1, 256>}, {pipeline_mode = #tpu.pipeline_mode<synchronous>, transform_indices = @transform_5, window_bounds = array<i64: 256, 896>}, {pipeline_mode = #tpu.pipeline_mode<synchronous>, transform_indices = @transform_6, window_bounds = array<i64: 1, 896>}, {transform_indices = @transform_7, window_bounds = array<i64: 8, 896>}]} {
    %c0 = arith.constant 0 : index
    %c0_0 = arith.constant 0 : index
    %0 = vector.load %arg1[%c0, %c0_0] : memref<8x32xf32, #tpu.memory_space<vmem>>, vector<8x32xf32>
    %1 = arith.truncf %0 : vector<8x32xf32> to vector<8x32xbf16>
    %c0_1 = arith.constant 0 : index
    %c0_2 = arith.constant 0 : index
    %2 = vector.load %arg2[%c0_1, %c0_2] : memref<32x64xbf16, #tpu.memory_space<vmem>>, vector<32x64xbf16>
    %cst = arith.constant dense<0.000000e+00> : vector<8x64xf32>
    %3 = tpu.matmul %1, %2, %cst {dimension_numbers = #tpu.dot_dimension_numbers<[1], [0], [0], [1], [0, 0, 1, 1], [], []>} : vector<8x32xbf16>, vector<32x64xbf16>, vector<8x64xf32> -> vector<8x64xf32>
    %c0_3 = arith.constant 0 : index
    %c0_4 = arith.constant 0 : index
    %4 = vector.load %arg3[%c0_3, %c0_4] : memref<1x64xf32, #tpu.memory_space<vmem>>, vector<1x64xf32>
    %5 = vector.broadcast %4 : vector<1x64xf32> to vector<8x64xf32>
    %6 = arith.addf %3, %5 : vector<8x64xf32>
    %cst_5 = arith.constant 0.000000e+00 : f32
    %7 = vector.broadcast %cst_5 : f32 to vector<8x64xf32>
    %8 = arith.maximumf %6, %7 : vector<8x64xf32>
    %9 = arith.truncf %8 : vector<8x64xf32> to vector<8x64xbf16>
    %c0_6 = arith.constant 0 : index
    %c0_7 = arith.constant 0 : index
    %10 = vector.load %arg4[%c0_6, %c0_7] : memref<64x256xbf16, #tpu.memory_space<vmem>>, vector<64x256xbf16>
    %cst_8 = arith.constant dense<0.000000e+00> : vector<8x256xf32>
    %11 = tpu.matmul %9, %10, %cst_8 {dimension_numbers = #tpu.dot_dimension_numbers<[1], [0], [0], [1], [0, 0, 1, 1], [], []>} : vector<8x64xbf16>, vector<64x256xbf16>, vector<8x256xf32> -> vector<8x256xf32>
    %c0_9 = arith.constant 0 : index
    %c0_10 = arith.constant 0 : index
    %12 = vector.load %arg5[%c0_9, %c0_10] : memref<1x256xf32, #tpu.memory_space<vmem>>, vector<1x256xf32>
    %13 = vector.broadcast %12 : vector<1x256xf32> to vector<8x256xf32>
    %14 = arith.addf %11, %13 : vector<8x256xf32>
    %cst_11 = arith.constant 0.000000e+00 : f32
    %15 = vector.broadcast %cst_11 : f32 to vector<8x256xf32>
    %16 = arith.maximumf %14, %15 : vector<8x256xf32>
    %17 = arith.truncf %16 : vector<8x256xf32> to vector<8x256xbf16>
    %c0_12 = arith.constant 0 : index
    %c0_13 = arith.constant 0 : index
    %18 = vector.load %arg6[%c0_12, %c0_13] : memref<256x896xbf16, #tpu.memory_space<vmem>>, vector<256x896xbf16>
    %cst_14 = arith.constant dense<0.000000e+00> : vector<8x896xf32>
    %19 = tpu.matmul %17, %18, %cst_14 {dimension_numbers = #tpu.dot_dimension_numbers<[1], [0], [0], [1], [0, 0, 1, 1], [], []>} : vector<8x256xbf16>, vector<256x896xbf16>, vector<8x896xf32> -> vector<8x896xf32>
    %c0_15 = arith.constant 0 : index
    %c0_16 = arith.constant 0 : index
    %20 = vector.load %arg7[%c0_15, %c0_16] : memref<1x896xf32, #tpu.memory_space<vmem>>, vector<1x896xf32>
    %21 = vector.broadcast %20 : vector<1x896xf32> to vector<8x896xf32>
    %22 = arith.addf %19, %21 : vector<8x896xf32>
    %cst_17 = arith.constant 0.000000e+00 : f32
    %23 = vector.broadcast %cst_17 : f32 to vector<8x896xf32>
    %24 = arith.subf %23, %22 : vector<8x896xf32>
    %25 = math.exp %24 : vector<8x896xf32>
    %cst_18 = arith.constant 1.000000e+00 : f32
    %26 = vector.broadcast %cst_18 : f32 to vector<8x896xf32>
    %27 = arith.addf %26, %25 : vector<8x896xf32>
    %28 = tpu.reciprocal %27 {approx = true} : vector<8x896xf32> -> vector<8x896xf32>
    %c0_19 = arith.constant 0 : index
    %c0_20 = arith.constant 0 : index
    %29 = vector.load %arg8[%c0_19, %c0_20] : memref<8x896xf32, #tpu.memory_space<vmem>>, vector<8x896xf32>
    tpu.vector_store %arg8[%c0_19, %c0_20], %28 {strides = array<i32>} : memref<8x896xf32, #tpu.memory_space<vmem>>, vector<8x896xf32>,
    return
  }
  func.func @transform_0(%arg0: i32) -> (i32, i32) {
    %c0_i32 = arith.constant 0 : i32
    %c0_i32_0 = arith.constant 0 : i32
    return %arg0, %c0_i32 : i32, i32
  }
  func.func @transform_1(%arg0: i32) -> (i32, i32) {
    %c0_i32 = arith.constant 0 : i32
    %c0_i32_0 = arith.constant 0 : i32
    %c0_i32_1 = arith.constant 0 : i32
    return %c0_i32, %c0_i32_0 : i32, i32
  }
  func.func @transform_2(%arg0: i32) -> (i32, i32) {
    %c0_i32 = arith.constant 0 : i32
    %c0_i32_0 = arith.constant 0 : i32
    %c0_i32_1 = arith.constant 0 : i32
    return %c0_i32, %c0_i32_0 : i32, i32
  }
  func.func @transform_3(%arg0: i32) -> (i32, i32) {
    %c0_i32 = arith.constant 0 : i32
    %c0_i32_0 = arith.constant 0 : i32
    %c0_i32_1 = arith.constant 0 : i32
    return %c0_i32, %c0_i32_0 : i32, i32
  }
  func.func @transform_4(%arg0: i32) -> (i32, i32) {
    %c0_i32 = arith.constant 0 : i32
    %c0_i32_0 = arith.constant 0 : i32
    %c0_i32_1 = arith.constant 0 : i32
    return %c0_i32, %c0_i32_0 : i32, i32
  }
  func.func @transform_5(%arg0: i32) -> (i32, i32) {
    %c0_i32 = arith.constant 0 : i32
    %c0_i32_0 = arith.constant 0 : i32
    %c0_i32_1 = arith.constant 0 : i32
    return %c0_i32, %c0_i32_0 : i32, i32
  }
  func.func @transform_6(%arg0: i32) -> (i32, i32) {
    %c0_i32 = arith.constant 0 : i32
    %c0_i32_0 = arith.constant 0 : i32
    %c0_i32_1 = arith.constant 0 : i32
    return %c0_i32, %c0_i32_0 : i32, i32
  }
  func.func @transform_7(%arg0: i32) -> (i32, i32) {
    %c0_i32 = arith.constant 0 : i32
    %c0_i32_0 = arith.constant 0 : i32
    return %arg0, %c0_i32 : i32, i32
  }
}

</mosaic_0001>

<llo_original>
// kernel: tpu_custom_call.1
$region0: #{tpu_custom_call.1}
  #allocation0 [shape = 'u32[]', space=smem, size = 0x4, offset = 0x4, fixed_abs, tag = 'smem constant byte address 0x4 - core index']
  #allocation1 [shape = 'u32[144,128]{1,0:T(1,128)}', space=vmem, size = 0x12000, scoped, tag = 'internal scratch']
  %s0 = inlined_call_operand.hbm [shape: f32[8,32], index: 0, kind: input, shape index: {}]
  %s1 = inlined_call_operand.hbm [shape: bf16[32,64], index: 1, kind: input, shape index: {}]
  %s2 = inlined_call_operand.vmem [shape: f32[1,64], index: 2, kind: input, shape index: {}]
  %s3 = inlined_call_operand.hbm [shape: bf16[64,256], index: 3, kind: input, shape index: {}]
  %s4 = inlined_call_operand.vmem [shape: f32[1,256], index: 4, kind: input, shape index: {}]
  %s5 = inlined_call_operand.hbm [shape: bf16[256,896], index: 5, kind: input, shape index: {}]
  %s6 = inlined_call_operand.vmem [shape: f32[1,896], index: 6, kind: input, shape index: {}]
  %s7 = inlined_call_operand.hbm [shape: f32[8,896], index: 7, kind: output, shape index: {}]
  %s8 = sld [smem:[#allocation0]]
  $region54: #{tpu_custom_call.1} parent=0
    _
  %s10 = ssub.s32 1, %s8
  %s11 = scalar_select 0, %s10, %s8
  $region1: #{tpu_custom_call.1} parent=0
    #allocation2 [shape = 'u8[4096]{0}', space=vmem, size = 0x1000, scoped, tag = 'input window, operand 0, single buffered']
    #allocation3 [shape = 's32[1]{0}', space=sflag, size = 0x4, scoped, tag = 'scoped memory for tpu_custom_call.1']
    #allocation4 [shape = 's32[1]{0}', space=sflag, size = 0x4, scoped, tag = 'scoped memory for tpu_custom_call.1']
    #allocation5 [shape = 'u8[8192]{0}', space=vmem, size = 0x2000, scoped, tag = 'input window, operand 1, single buffered']
    #allocation6 [shape = 's32[1]{0}', space=sflag, size = 0x4, scoped, tag = 'scoped memory for tpu_custom_call.1']
    #allocation7 [shape = 'u8[32768]{0}', space=vmem, size = 0x8000, scoped, tag = 'input window, operand 3, single buffered']
    #allocation8 [shape = 'u8[458752]{0}', space=vmem, size = 0x70000, scoped, tag = 'input window, operand 5, single buffered']
    #allocation9 [shape = 's32[1]{0}', space=sflag, size = 0x4, scoped, tag = 'scoped memory for tpu_custom_call.1']
    #allocation10 [shape = 'u8[28672]{0}', space=vmem, size = 0x7000, scoped, tag = 'output window, operand 0, single buffered']
    %12 = vsyncpa [#allocation3], 0
    %13 = vsyncpa [#allocation6], 0
    %14 = vsyncpa [#allocation9], 0
    %15 = vsyncpa [#allocation4], 0
    // Predicated region
    $region2: #{tpu_custom_call.1} parent=1 // pred_check
      _
    $region3: #{tpu_custom_call.1} parent=1 // pred_check_branch
      %17 = sbr.rel (0) target = $region5
    $region4: #{tpu_custom_call.1} parent=1 // pred_region
      %s19 = ssub.s32 128, 128
      %20 = vsyncadd [#allocation3], %s19
      %s22 = sshll.u32 [#allocation2], 4
      %s23 = int_to_ptr.vmem [resolvable:$true] %s22
      %25 = dma.hbm_to_vmem [thread:$0]  %s0, 128, %s23, [#allocation3]
    $region5: #{tpu_custom_call.1} parent=1 // pred_fallthru
      _
    // Predicated region
    $region6: #{tpu_custom_call.1} parent=1 // pred_check
      _
    $region7: #{tpu_custom_call.1} parent=1 // pred_check_branch
      %27 = sbr.rel (0) target = $region9
    $region8: #{tpu_custom_call.1} parent=1 // pred_region
      %s29 = ssub.s32 256, 256
      %30 = vsyncadd [#allocation6], %s29
      %s31 = sshll.u32 [#allocation5], 4
      %s32 = int_to_ptr.vmem [resolvable:$true] %s31
      %37 = dma.hbm_to_vmem [thread:$0]  %s1, 256, %s32, [#allocation6], 64, 64, 4
    $region9: #{tpu_custom_call.1} parent=1 // pred_fallthru
      _
    // Predicated region
    $region10: #{tpu_custom_call.1} parent=1 // pred_check
      _
    $region11: #{tpu_custom_call.1} parent=1 // pred_check_branch
      %39 = sbr.rel (0) target = $region13
    $region12: #{tpu_custom_call.1} parent=1 // pred_region
      _
    $region13: #{tpu_custom_call.1} parent=1 // pred_fallthru
      _
    // Predicated region
    $region14: #{tpu_custom_call.1} parent=1 // pred_check
      _
    $region15: #{tpu_custom_call.1} parent=1 // pred_check_branch
      %41 = sbr.rel (0) target = $region17
    $region16: #{tpu_custom_call.1} parent=1 // pred_region
      %s43 = ssub.s32 1024, 1024
      %44 = vsyncadd [#allocation6], %s43
      %s45 = sshll.u32 [#allocation7], 4
      %s46 = int_to_ptr.vmem [resolvable:$true] %s45
      %51 = dma.hbm_to_vmem [thread:$0]  %s3, 1024, %s46, [#allocation6], 128, 128, 8
    $region17: #{tpu_custom_call.1} parent=1 // pred_fallthru
      _
    // Predicated region
    $region18: #{tpu_custom_call.1} parent=1 // pred_check
      _
    $region19: #{tpu_custom_call.1} parent=1 // pred_check_branch
      %53 = sbr.rel (0) target = $region21
    $region20: #{tpu_custom_call.1} parent=1 // pred_region
      _
    $region21: #{tpu_custom_call.1} parent=1 // pred_fallthru
      _
    // Predicated region
    $region22: #{tpu_custom_call.1} parent=1 // pred_check
      _
    $region23: #{tpu_custom_call.1} parent=1 // pred_check_branch
      %55 = sbr.rel (0) target = $region25
    $region24: #{tpu_custom_call.1} parent=1 // pred_region
      %s57 = ssub.s32 14336, 14336
      %58 = vsyncadd [#allocation9], %s57
      %s59 = sshll.u32 [#allocation8], 4
      %s60 = int_to_ptr.vmem [resolvable:$true] %s59
      %65 = dma.hbm_to_vmem [thread:$0]  %s5, 14336, %s60, [#allocation9], 448, 448, 28
    $region25: #{tpu_custom_call.1} parent=1 // pred_fallthru
      _
    // Predicated region
    $region26: #{tpu_custom_call.1} parent=1 // pred_check
      _
    $region27: #{tpu_custom_call.1} parent=1 // pred_check_branch
      %67 = sbr.rel (0) target = $region29
    $region28: #{tpu_custom_call.1} parent=1 // pred_region
      _
    $region29: #{tpu_custom_call.1} parent=1 // pred_fallthru
      _
    // Predicated region
    $region30: #{tpu_custom_call.1} parent=1 // pred_check
      _
    $region31: #{tpu_custom_call.1} parent=1 // pred_check_branch
      %69 = sbr.rel (0) target = $region33
    $region32: #{tpu_custom_call.1} parent=1 // pred_region
      %70 = dma.done [#allocation3], 128
    $region33: #{tpu_custom_call.1} parent=1 // pred_fallthru
      _
    // Predicated region
    $region34: #{tpu_custom_call.1} parent=1 // pred_check
      _
    $region35: #{tpu_custom_call.1} parent=1 // pred_check_branch
      %72 = sbr.rel (0) target = $region37
    $region36: #{tpu_custom_call.1} parent=1 // pred_region
      %73 = dma.done [#allocation6], 256
    $region37: #{tpu_custom_call.1} parent=1 // pred_fallthru
      _
    // Predicated region
    $region38: #{tpu_custom_call.1} parent=1 // pred_check
      _
    $region39: #{tpu_custom_call.1} parent=1 // pred_check_branch
      %75 = sbr.rel (0) target = $region41
    $region40: #{tpu_custom_call.1} parent=1 // pred_region
      %76 = dma.done [#allocation6], 1024
    $region41: #{tpu_custom_call.1} parent=1 // pred_fallthru
      _
    // Predicated region
    $region42: #{tpu_custom_call.1} parent=1 // pred_check
      _
    $region43: #{tpu_custom_call.1} parent=1 // pred_check_branch
      %78 = sbr.rel (0) target = $region45
    $region44: #{tpu_custom_call.1} parent=1 // pred_region
      %79 = dma.done [#allocation9], 14336
    $region45: #{tpu_custom_call.1} parent=1 // pred_fallthru
      _
    %v81 = vld [vmem:[#allocation2] sm:$0xff]
    %v82 = vpack.c.bf16 %v81, %v81
    %v83 = vld [vmem:[#allocation5] sm:$0xf]
    %v84 = vld [vmem:[#allocation5 + $0x4] sm:$0xf]
    %v85 = vld [vmem:[#allocation5 + $0x8] sm:$0xf]
    %v86 = vld [vmem:[#allocation5 + $0xc] sm:$0xf]
    %v87 = vld [vmem:[%s2] sm:$0x1]
    %v89 = vlaneseq
    %v90 = vshrl.u32 %v89, 7
    %v91 = vsub.s32 0, %v90
    %v92 = vrot.slane %v87, %v91
    %v98 = vunpack.c.l.b16 %v83
    %v99 = vunpack.c.l.b16 %v84
    %v100 = vunpack.c.l.b16 %v85
    %v101 = vunpack.c.l.b16 %v86
    %v102 = vpack.c.b16 %v99, %v98
    %v103 = vpack.c.b16 %v101, %v100
    %vm106 = vcmask 261120
    %v108 = vsel %vm106, %v82, 0
    %110 = vmatprep.subr.bf16.mxu0 0
    %111 = vmatpush1.bf16.msra.mxu0 %v102
    %112 = vmatprep.subr.bf16.mxu0 0
    %113 = vmatpush1.bf16.msra.mxu0 %v103
    %114 = vmatprep.subr.bf16.mxu0 0
    %115 = vmatpush1.bf16.msra.mxu0 0
    %116 = vmatprep.subr.bf16.mxu0 0
    %117 = vmatpush1.bf16.msra.mxu0 0
    %118 = vmatprep.subr.bf16.mxu0 0
    %119 = vmatpush1.bf16.msra.mxu0 0
    %120 = vmatprep.subr.bf16.mxu0 0
    %121 = vmatpush1.bf16.msra.mxu0 0
    %122 = vmatprep.subr.bf16.mxu0 0
    %123 = vmatpush1.bf16.msra.mxu0 0
    %124 = vmatprep.subr.bf16.mxu0 0
    %125 = vmatpush1.bf16.msra.mxu0 0
    %126 = vmatprep.subr.bf16.mxu0 0
    %127 = vmatpush1.bf16.msra.mxu0 0
    %128 = vmatprep.subr.bf16.mxu0 0
    %129 = vmatpush1.bf16.msra.mxu0 0
    %130 = vmatprep.subr.bf16.mxu0 0
    %131 = vmatpush1.bf16.msra.mxu0 0
    %132 = vmatprep.subr.bf16.mxu0 0
    %133 = vmatpush1.bf16.msra.mxu0 0
    %134 = vmatprep.subr.bf16.mxu0 0
    %135 = vmatpush1.bf16.msra.mxu0 0
    %136 = vmatprep.subr.bf16.mxu0 0
    %137 = vmatpush1.bf16.msra.mxu0 0
    %138 = vmatprep.subr.bf16.mxu0 0
    %139 = vmatpush1.bf16.msra.mxu0 0
    %140 = vmatprep.subr.bf16.mxu0 0
    %141 = vmatpush1.bf16.msra.mxu0 0
    %142 = vmatprep.mubr.bf16.mxu0 0
    %143 = vmatmul.mubr.bf16.gmra.mrb[0].mxu0 %v108
    %v144 = vpop.f32.mrb[0].mxu0
    %v145 = vadd.f32 %v92, %v144
    %v146 = vpop.f32.mrb[0].mxu0
    %v147 = vpop.f32.mrb[0].mxu0
    %v148 = vpop.f32.mrb[0].mxu0
    %149 = vdwg.mxu0
    %v150 = vmax.f32 %v145, 0.0
    %v151 = vpack.c.bf16 %v150, %v150
    %v152 = vld [vmem:[#allocation7] sm:$0xff]
    %v153 = vld [vmem:[#allocation7 + $0x8] sm:$0xff]
    %v154 = vld [vmem:[#allocation7 + $0x10] sm:$0xff]
    %v155 = vld [vmem:[#allocation7 + $0x18] sm:$0xff]
    %v156 = vld [vmem:[#allocation7 + $0x20] sm:$0xff]
    %v157 = vld [vmem:[#allocation7 + $0x28] sm:$0xff]
    %v158 = vld [vmem:[#allocation7 + $0x30] sm:$0xff]
    %v159 = vld [vmem:[#allocation7 + $0x38] sm:$0xff]
    %v160 = vld [vmem:[%s4] sm:$0x3]
    %v162 = vlaneseq
    %v163 = vshrl.u32 %v162, 7
    %v164 = vsub.s32 0, %v163
    %v165 = vrot.slane %v160, %v164
    %v166 = vlaneseq
    %v167 = vshrl.u32 %v166, 7
    %v168 = vsub.s32 1, %v167
    %v169 = vrot.slane %v160, %v168
    %v180 = vunpack.c.l.b16 %v152
    %v181 = vunpack.c.h.b16 %v152
    %v182 = vunpack.c.l.b16 %v153
    %v183 = vunpack.c.h.b16 %v153
    %v184 = vunpack.c.l.b16 %v154
    %v185 = vunpack.c.h.b16 %v154
    %v186 = vunpack.c.l.b16 %v155
    %v187 = vunpack.c.h.b16 %v155
    %v188 = vunpack.c.l.b16 %v156
    %v189 = vunpack.c.h.b16 %v156
    %v190 = vunpack.c.l.b16 %v157
    %v191 = vunpack.c.h.b16 %v157
    %v192 = vunpack.c.l.b16 %v158
    %v193 = vunpack.c.h.b16 %v158
    %v194 = vunpack.c.l.b16 %v159
    %v195 = vunpack.c.h.b16 %v159
    %v196 = vpack.c.b16 %v182, %v180
    %v197 = vpack.c.b16 %v183, %v181
    %v198 = vpack.c.b16 %v186, %v184
    %v199 = vpack.c.b16 %v187, %v185
    %v200 = vpack.c.b16 %v190, %v188
    %v201 = vpack.c.b16 %v191, %v189
    %v202 = vpack.c.b16 %v194, %v192
    %v203 = vpack.c.b16 %v195, %v193
    %vm212 = vcmask 523264
    %v214 = vsel %vm212, %v151, 0
    %216 = vmatprep.subr.bf16.mxu0 %v197
    %217 = vmatpush1.bf16.msra.mxu0 %v196
    %218 = vmatprep.subr.bf16.mxu0 %v199
    %219 = vmatpush1.bf16.msra.mxu0 %v198
    %220 = vmatprep.subr.bf16.mxu0 %v201
    %221 = vmatpush1.bf16.msra.mxu0 %v200
    %222 = vmatprep.subr.bf16.mxu0 %v203
    %223 = vmatpush1.bf16.msra.mxu0 %v202
    %224 = vmatprep.subr.bf16.mxu0 0
    %225 = vmatpush1.bf16.msra.mxu0 0
    %226 = vmatprep.subr.bf16.mxu0 0
    %227 = vmatpush1.bf16.msra.mxu0 0
    %228 = vmatprep.subr.bf16.mxu0 0
    %229 = vmatpush1.bf16.msra.mxu0 0
    %230 = vmatprep.subr.bf16.mxu0 0
    %231 = vmatpush1.bf16.msra.mxu0 0
    %232 = vmatprep.subr.bf16.mxu0 0
    %233 = vmatpush1.bf16.msra.mxu0 0
    %234 = vmatprep.subr.bf16.mxu0 0
    %235 = vmatpush1.bf16.msra.mxu0 0
    %236 = vmatprep.subr.bf16.mxu0 0
    %237 = vmatpush1.bf16.msra.mxu0 0
    %238 = vmatprep.subr.bf16.mxu0 0
    %239 = vmatpush1.bf16.msra.mxu0 0
    %240 = vmatprep.subr.bf16.mxu0 0
    %241 = vmatpush1.bf16.msra.mxu0 0
    %242 = vmatprep.subr.bf16.mxu0 0
    %243 = vmatpush1.bf16.msra.mxu0 0
    %244 = vmatprep.subr.bf16.mxu0 0
    %245 = vmatpush1.bf16.msra.mxu0 0
    %246 = vmatprep.subr.bf16.mxu0 0
    %247 = vmatpush1.bf16.msra.mxu0 0
    %248 = vmatprep.mubr.bf16.mxu0 0
    %249 = vmatmul.mubr.bf16.gmra.mrb[0].mxu0 %v214
    %v250 = vpop.f32.mrb[0].mxu0
    %v251 = vadd.f32 %v165, %v250
    %v252 = vpop.f32.mrb[0].mxu0
    %v253 = vadd.f32 %v169, %v252
    %v254 = vpop.f32.mrb[0].mxu0
    %v255 = vpop.f32.mrb[0].mxu0
    %256 = vdwg.mxu0
    %v257 = vmax.f32 %v251, 0.0
    %v258 = vmax.f32 %v253, 0.0
    %v259 = vpack.c.bf16 %v257, %v257
    %v260 = vpack.c.bf16 %v258, %v258
    %v261 = vld [vmem:[#allocation8] sm:$0xff]
    %v262 = vld [vmem:[#allocation8 + $0x8] sm:$0xff]
    %v263 = vld [vmem:[#allocation8 + $0x10] sm:$0xff]
    %v264 = vld [vmem:[#allocation8 + $0x18] sm:$0xf]
    %v265 = vld [vmem:[#allocation8 + $0x1c] sm:$0xff]
    %v266 = vld [vmem:[#allocation8 + $0x24] sm:$0xff]
    %v267 = vld [vmem:[#allocation8 + $0x2c] sm:$0xff]
    %v268 = vld [vmem:[#allocation8 + $0x34] sm:$0xf]
    %v269 = vld [vmem:[#allocation8 + $0x38] sm:$0xff]
    %v270 = vld [vmem:[#allocation8 + $0x40] sm:$0xff]
    %v271 = vld [vmem:[#allocation8 + $0x48] sm:$0xff]
    %v272 = vld [vmem:[#allocation8 + $0x50] sm:$0xf]
    %v273 = vld [vmem:[#allocation8 + $0x54] sm:$0xff]
    %v274 = vld [vmem:[#allocation8 + $0x5c] sm:$0xff]
    %v275 = vld [vmem:[#allocation8 + $0x64] sm:$0xff]
    %v276 = vld [vmem:[#allocation8 + $0x6c] sm:$0xf]
    %v277 = vld [vmem:[#allocation8 + $0x70] sm:$0xff]
    %v278 = vld [vmem:[#allocation8 + $0x78] sm:$0xff]
    %v279 = vld [vmem:[#allocation8 + $0x80] sm:$0xff]
    %v280 = vld [vmem:[#allocation8 + $0x88] sm:$0xf]
    %v281 = vld [vmem:[#allocation8 + $0x8c] sm:$0xff]
    %v282 = vld [vmem:[#allocation8 + $0x94] sm:$0xff]
    %v283 = vld [vmem:[#allocation8 + $0x9c] sm:$0xff]
    %v284 = vld [vmem:[#allocation8 + $0xa4] sm:$0xf]
    %v285 = vld [vmem:[#allocation8 + $0xa8] sm:$0xff]
    %v286 = vld [vmem:[#allocation8 + $0xb0] sm:$0xff]
    %v287 = vld [vmem:[#allocation8 + $0xb8] sm:$0xff]
    %v288 = vld [vmem:[#allocation8 + $0xc0] sm:$0xf]
    %v289 = vld [vmem:[#allocation8 + $0xc4] sm:$0xff]
    %v290 = vld [vmem:[#allocation8 + $0xcc] sm:$0xff]
    %v291 = vld [vmem:[#allocation8 + $0xd4] sm:$0xff]
    %v292 = vld [vmem:[#allocation8 + $0xdc] sm:$0xf]
    %v293 = vld [vmem:[#allocation8 + $0xe0] sm:$0xff]
    %v294 = vld [vmem:[#allocation8 + $0xe8] sm:$0xff]
    %v295 = vld [vmem:[#allocation8 + $0xf0] sm:$0xff]
    %v296 = vld [vmem:[#allocation8 + $0xf8] sm:$0xf]
    %v297 = vld [vmem:[#allocation8 + $0xfc] sm:$0xff]
    %v298 = vld [vmem:[#allocation8 + $0x104] sm:$0xff]
    %v299 = vld [vmem:[#allocation8 + $0x10c] sm:$0xff]
    %v300 = vld [vmem:[#allocation8 + $0x114] sm:$0xf]
    %v301 = vld [vmem:[#allocation8 + $0x118] sm:$0xff]
    %v302 = vld [vmem:[#allocation8 + $0x120] sm:$0xff]
    %v303 = vld [vmem:[#allocation8 + $0x128] sm:$0xff]
    %v304 = vld [vmem:[#allocation8 + $0x130] sm:$0xf]
    %v305 = vld [vmem:[#allocation8 + $0x134] sm:$0xff]
    %v306 = vld [vmem:[#allocation8 + $0x13c] sm:$0xff]
    %v307 = vld [vmem:[#allocation8 + $0x144] sm:$0xff]
    %v308 = vld [vmem:[#allocation8 + $0x14c] sm:$0xf]
    %v309 = vld [vmem:[#allocation8 + $0x150] sm:$0xff]
    %v310 = vld [vmem:[#allocation8 + $0x158] sm:$0xff]
    %v311 = vld [vmem:[#allocation8 + $0x160] sm:$0xff]
    %v312 = vld [vmem:[#allocation8 + $0x168] sm:$0xf]
    %v313 = vld [vmem:[#allocation8 + $0x16c] sm:$0xff]
    %v314 = vld [vmem:[#allocation8 + $0x174] sm:$0xff]
    %v315 = vld [vmem:[#allocation8 + $0x17c] sm:$0xff]
    %v316 = vld [vmem:[#allocation8 + $0x184] sm:$0xf]
    %v317 = vld [vmem:[#allocation8 + $0x188] sm:$0xff]
    %v318 = vld [vmem:[#allocation8 + $0x190] sm:$0xff]
    %v319 = vld [vmem:[#allocation8 + $0x198] sm:$0xff]
    %v320 = vld [vmem:[#allocation8 + $0x1a0] sm:$0xf]
    %v321 = vld [vmem:[#allocation8 + $0x1a4] sm:$0xff]
    %v322 = vld [vmem:[#allocation8 + $0x1ac] sm:$0xff]
    %v323 = vld [vmem:[#allocation8 + $0x1b4] sm:$0xff]
    %v324 = vld [vmem:[#allocation8 + $0x1bc] sm:$0xf]
    %v325 = vld [vmem:[#allocation8 + $0x1c0] sm:$0xff]
    %v326 = vld [vmem:[#allocation8 + $0x1c8] sm:$0xff]
    %v327 = vld [vmem:[#allocation8 + $0x1d0] sm:$0xff]
    %v328 = vld [vmem:[#allocation8 + $0x1d8] sm:$0xf]
    %v329 = vld [vmem:[#allocation8 + $0x1dc] sm:$0xff]
    %v330 = vld [vmem:[#allocation8 + $0x1e4] sm:$0xff]
    %v331 = vld [vmem:[#allocation8 + $0x1ec] sm:$0xff]
    %v332 = vld [vmem:[#allocation8 + $0x1f4] sm:$0xf]
    %v333 = vld [vmem:[#allocation8 + $0x1f8] sm:$0xff]
    %v334 = vld [vmem:[#allocation8 + $0x200] sm:$0xff]
    %v335 = vld [vmem:[#allocation8 + $0x208] sm:$0xff]
    %v336 = vld [vmem:[#allocation8 + $0x210] sm:$0xf]
    %v337 = vld [vmem:[#allocation8 + $0x214] sm:$0xff]
    %v338 = vld [vmem:[#allocation8 + $0x21c] sm:$0xff]
    %v339 = vld [vmem:[#allocation8 + $0x224] sm:$0xff]
    %v340 = vld [vmem:[#allocation8 + $0x22c] sm:$0xf]
    %v341 = vld [vmem:[#allocation8 + $0x230] sm:$0xff]
    %v342 = vld [vmem:[#allocation8 + $0x238] sm:$0xff]
    %v343 = vld [vmem:[#allocation8 + $0x240] sm:$0xff]
    %v344 = vld [vmem:[#allocation8 + $0x248] sm:$0xf]
    %v345 = vld [vmem:[#allocation8 + $0x24c] sm:$0xff]
    %v346 = vld [vmem:[#allocation8 + $0x254] sm:$0xff]
    %v347 = vld [vmem:[#allocation8 + $0x25c] sm:$0xff]
    %v348 = vld [vmem:[#allocation8 + $0x264] sm:$0xf]
    %v349 = vld [vmem:[#allocation8 + $0x268] sm:$0xff]
    %v350 = vld [vmem:[#allocation8 + $0x270] sm:$0xff]
    %v351 = vld [vmem:[#allocation8 + $0x278] sm:$0xff]
    %v352 = vld [vmem:[#allocation8 + $0x280] sm:$0xf]
    %v353 = vld [vmem:[#allocation8 + $0x284] sm:$0xff]
    %v354 = vld [vmem:[#allocation8 + $0x28c] sm:$0xff]
    %v355 = vld [vmem:[#allocation8 + $0x294] sm:$0xff]
    %v356 = vld [vmem:[#allocation8 + $0x29c] sm:$0xf]
    %v357 = vld [vmem:[#allocation8 + $0x2a0] sm:$0xff]
    %v358 = vld [vmem:[#allocation8 + $0x2a8] sm:$0xff]
    %v359 = vld [vmem:[#allocation8 + $0x2b0] sm:$0xff]
    %v360 = vld [vmem:[#allocation8 + $0x2b8] sm:$0xf]
    %v361 = vld [vmem:[#allocation8 + $0x2bc] sm:$0xff]
    %v362 = vld [vmem:[#allocation8 + $0x2c4] sm:$0xff]
    %v363 = vld [vmem:[#allocation8 + $0x2cc] sm:$0xff]
    %v364 = vld [vmem:[#allocation8 + $0x2d4] sm:$0xf]
    %v365 = vld [vmem:[#allocation8 + $0x2d8] sm:$0xff]
    %v366 = vld [vmem:[#allocation8 + $0x2e0] sm:$0xff]
    %v367 = vld [vmem:[#allocation8 + $0x2e8] sm:$0xff]
    %v368 = vld [vmem:[#allocation8 + $0x2f0] sm:$0xf]
    %v369 = vld [vmem:[#allocation8 + $0x2f4] sm:$0xff]
    %v370 = vld [vmem:[#allocation8 + $0x2fc] sm:$0xff]
    %v371 = vld [vmem:[#allocation8 + $0x304] sm:$0xff]
    %v372 = vld [vmem:[#allocation8 + $0x30c] sm:$0xf]
    %v373 = vld [vmem:[#allocation8 + $0x310] sm:$0xff]
    %v374 = vld [vmem:[#allocation8 + $0x318] sm:$0xff]
    %v375 = vld [vmem:[#allocation8 + $0x320] sm:$0xff]
    %v376 = vld [vmem:[#allocation8 + $0x328] sm:$0xf]
    %v377 = vld [vmem:[#allocation8 + $0x32c] sm:$0xff]
    %v378 = vld [vmem:[#allocation8 + $0x334] sm:$0xff]
    %v379 = vld [vmem:[#allocation8 + $0x33c] sm:$0xff]
    %v380 = vld [vmem:[#allocation8 + $0x344] sm:$0xf]
    %v381 = vld [vmem:[#allocation8 + $0x348] sm:$0xff]
    %v382 = vld [vmem:[#allocation8 + $0x350] sm:$0xff]
    %v383 = vld [vmem:[#allocation8 + $0x358] sm:$0xff]
    %v384 = vld [vmem:[#allocation8 + $0x360] sm:$0xf]
    %v385 = vld [vmem:[#allocation8 + $0x364] sm:$0xff]
    %v386 = vld [vmem:[#allocation8 + $0x36c] sm:$0xff]
    %v387 = vld [vmem:[#allocation8 + $0x374] sm:$0xff]
    %v388 = vld [vmem:[#allocation8 + $0x37c] sm:$0xf]
    %v389 = vld [vmem:[%s6] sm:$0xff]
    %v391 = vlaneseq
    %v392 = vshrl.u32 %v391, 7
    %v393 = vsub.s32 0, %v392
    %v394 = vrot.slane %v389, %v393
    %v395 = vlaneseq
    %v396 = vshrl.u32 %v395, 7
    %v397 = vsub.s32 1, %v396
    %v398 = vrot.slane %v389, %v397
    %v399 = vlaneseq
    %v400 = vshrl.u32 %v399, 7
    %v401 = vsub.s32 2, %v400
    %v402 = vrot.slane %v389, %v401
    %v403 = vlaneseq
    %v404 = vshrl.u32 %v403, 7
    %v405 = vsub.s32 3, %v404
    %v406 = vrot.slane %v389, %v405
    %v407 = vlaneseq
    %v408 = vshrl.u32 %v407, 7
    %v409 = vsub.s32 4, %v408
    %v410 = vrot.slane %v389, %v409
    %v411 = vlaneseq
    %v412 = vshrl.u32 %v411, 7
    %v413 = vsub.s32 5, %v412
    %v414 = vrot.slane %v389, %v413
    %v415 = vlaneseq
    %v416 = vshrl.u32 %v415, 7
    %v417 = vsub.s32 6, %v416
    %v418 = vrot.slane %v389, %v417
    %v554 = vunpack.c.l.b16 %v261
    %v555 = vunpack.c.h.b16 %v261
    %v556 = vunpack.c.l.b16 %v262
    %v557 = vunpack.c.h.b16 %v262
    %v558 = vunpack.c.l.b16 %v263
    %v559 = vunpack.c.h.b16 %v263
    %v560 = vunpack.c.l.b16 %v264
    %v561 = vunpack.c.l.b16 %v265
    %v562 = vunpack.c.h.b16 %v265
    %v563 = vunpack.c.l.b16 %v266
    %v564 = vunpack.c.h.b16 %v266
    %v565 = vunpack.c.l.b16 %v267
    %v566 = vunpack.c.h.b16 %v267
    %v567 = vunpack.c.l.b16 %v268
    %v568 = vunpack.c.l.b16 %v269
    %v569 = vunpack.c.h.b16 %v269
    %v570 = vunpack.c.l.b16 %v270
    %v571 = vunpack.c.h.b16 %v270
    %v572 = vunpack.c.l.b16 %v271
    %v573 = vunpack.c.h.b16 %v271
    %v574 = vunpack.c.l.b16 %v272
    %v575 = vunpack.c.l.b16 %v273
    %v576 = vunpack.c.h.b16 %v273
    %v577 = vunpack.c.l.b16 %v274
    %v578 = vunpack.c.h.b16 %v274
    %v579 = vunpack.c.l.b16 %v275
    %v580 = vunpack.c.h.b16 %v275
    %v581 = vunpack.c.l.b16 %v276
    %v582 = vunpack.c.l.b16 %v277
    %v583 = vunpack.c.h.b16 %v277
    %v584 = vunpack.c.l.b16 %v278
    %v585 = vunpack.c.h.b16 %v278
    %v586 = vunpack.c.l.b16 %v279
    %v587 = vunpack.c.h.b16 %v279
    %v588 = vunpack.c.l.b16 %v280
    %v589 = vunpack.c.l.b16 %v281
    %v590 = vunpack.c.h.b16 %v281
    %v591 = vunpack.c.l.b16 %v282
    %v592 = vunpack.c.h.b16 %v282
    %v593 = vunpack.c.l.b16 %v283
    %v594 = vunpack.c.h.b16 %v283
    %v595 = vunpack.c.l.b16 %v284
    %v596 = vunpack.c.l.b16 %v285
    %v597 = vunpack.c.h.b16 %v285
    %v598 = vunpack.c.l.b16 %v286
    %v599 = vunpack.c.h.b16 %v286
    %v600 = vunpack.c.l.b16 %v287
    %v601 = vunpack.c.h.b16 %v287
    %v602 = vunpack.c.l.b16 %v288
    %v603 = vunpack.c.l.b16 %v289
    %v604 = vunpack.c.h.b16 %v289
    %v605 = vunpack.c.l.b16 %v290
    %v606 = vunpack.c.h.b16 %v290
    %v607 = vunpack.c.l.b16 %v291
    %v608 = vunpack.c.h.b16 %v291
    %v609 = vunpack.c.l.b16 %v292
    %v610 = vunpack.c.l.b16 %v293
    %v611 = vunpack.c.h.b16 %v293
    %v612 = vunpack.c.l.b16 %v294
    %v613 = vunpack.c.h.b16 %v294
    %v614 = vunpack.c.l.b16 %v295
    %v615 = vunpack.c.h.b16 %v295
    %v616 = vunpack.c.l.b16 %v296
    %v617 = vunpack.c.l.b16 %v297
    %v618 = vunpack.c.h.b16 %v297
    %v619 = vunpack.c.l.b16 %v298
    %v620 = vunpack.c.h.b16 %v298
    %v621 = vunpack.c.l.b16 %v299
    %v622 = vunpack.c.h.b16 %v299
    %v623 = vunpack.c.l.b16 %v300
    %v624 = vunpack.c.l.b16 %v301
    %v625 = vunpack.c.h.b16 %v301
    %v626 = vunpack.c.l.b16 %v302
    %v627 = vunpack.c.h.b16 %v302
    %v628 = vunpack.c.l.b16 %v303
    %v629 = vunpack.c.h.b16 %v303
    %v630 = vunpack.c.l.b16 %v304
    %v631 = vunpack.c.l.b16 %v305
    %v632 = vunpack.c.h.b16 %v305
    %v633 = vunpack.c.l.b16 %v306
    %v634 = vunpack.c.h.b16 %v306
    %v635 = vunpack.c.l.b16 %v307
    %v636 = vunpack.c.h.b16 %v307
    %v637 = vunpack.c.l.b16 %v308
    %v638 = vunpack.c.l.b16 %v309
    %v639 = vunpack.c.h.b16 %v309
    %v640 = vunpack.c.l.b16 %v310
    %v641 = vunpack.c.h.b16 %v310
    %v642 = vunpack.c.l.b16 %v311
    %v643 = vunpack.c.h.b16 %v311
    %v644 = vunpack.c.l.b16 %v312
    %v645 = vunpack.c.l.b16 %v313
    %v646 = vunpack.c.h.b16 %v313
    %v647 = vunpack.c.l.b16 %v314
    %v648 = vunpack.c.h.b16 %v314
    %v649 = vunpack.c.l.b16 %v315
    %v650 = vunpack.c.h.b16 %v315
    %v651 = vunpack.c.l.b16 %v316
    %v652 = vunpack.c.l.b16 %v317
    %v653 = vunpack.c.h.b16 %v317
    %v654 = vunpack.c.l.b16 %v318
    %v655 = vunpack.c.h.b16 %v318
    %v656 = vunpack.c.l.b16 %v319
    %v657 = vunpack.c.h.b16 %v319
    %v658 = vunpack.c.l.b16 %v320
    %v659 = vunpack.c.l.b16 %v321
    %v660 = vunpack.c.h.b16 %v321
    %v661 = vunpack.c.l.b16 %v322
    %v662 = vunpack.c.h.b16 %v322
    %v663 = vunpack.c.l.b16 %v323
    %v664 = vunpack.c.h.b16 %v323
    %v665 = vunpack.c.l.b16 %v324
    %v666 = vunpack.c.l.b16 %v325
    %v667 = vunpack.c.h.b16 %v325
    %v668 = vunpack.c.l.b16 %v326
    %v669 = vunpack.c.h.b16 %v326
    %v670 = vunpack.c.l.b16 %v327
    %v671 = vunpack.c.h.b16 %v327
    %v672 = vunpack.c.l.b16 %v328
    %v673 = vunpack.c.l.b16 %v329
    %v674 = vunpack.c.h.b16 %v329
    %v675 = vunpack.c.l.b16 %v330
    %v676 = vunpack.c.h.b16 %v330
    %v677 = vunpack.c.l.b16 %v331
    %v678 = vunpack.c.h.b16 %v331
    %v679 = vunpack.c.l.b16 %v332
    %v680 = vunpack.c.l.b16 %v333
    %v681 = vunpack.c.h.b16 %v333
    %v682 = vunpack.c.l.b16 %v334
    %v683 = vunpack.c.h.b16 %v334
    %v684 = vunpack.c.l.b16 %v335
    %v685 = vunpack.c.h.b16 %v335
    %v686 = vunpack.c.l.b16 %v336
    %v687 = vunpack.c.l.b16 %v337
    %v688 = vunpack.c.h.b16 %v337
    %v689 = vunpack.c.l.b16 %v338
    %v690 = vunpack.c.h.b16 %v338
    %v691 = vunpack.c.l.b16 %v339
    %v692 = vunpack.c.h.b16 %v339
    %v693 = vunpack.c.l.b16 %v340
    %v694 = vunpack.c.l.b16 %v341
    %v695 = vunpack.c.h.b16 %v341
    %v696 = vunpack.c.l.b16 %v342
    %v697 = vunpack.c.h.b16 %v342
    %v698 = vunpack.c.l.b16 %v343
    %v699 = vunpack.c.h.b16 %v343
    %v700 = vunpack.c.l.b16 %v344
    %v701 = vunpack.c.l.b16 %v345
    %v702 = vunpack.c.h.b16 %v345
    %v703 = vunpack.c.l.b16 %v346
    %v704 = vunpack.c.h.b16 %v346
    %v705 = vunpack.c.l.b16 %v347
    %v706 = vunpack.c.h.b16 %v347
    %v707 = vunpack.c.l.b16 %v348
    %v708 = vunpack.c.l.b16 %v349
    %v709 = vunpack.c.h.b16 %v349
    %v710 = vunpack.c.l.b16 %v350
    %v711 = vunpack.c.h.b16 %v350
    %v712 = vunpack.c.l.b16 %v351
    %v713 = vunpack.c.h.b16 %v351
    %v714 = vunpack.c.l.b16 %v352
    %v715 = vunpack.c.l.b16 %v353
    %v716 = vunpack.c.h.b16 %v353
    %v717 = vunpack.c.l.b16 %v354
    %v718 = vunpack.c.h.b16 %v354
    %v719 = vunpack.c.l.b16 %v355
    %v720 = vunpack.c.h.b16 %v355
    %v721 = vunpack.c.l.b16 %v356
    %v722 = vunpack.c.l.b16 %v357
    %v723 = vunpack.c.h.b16 %v357
    %v724 = vunpack.c.l.b16 %v358
    %v725 = vunpack.c.h.b16 %v358
    %v726 = vunpack.c.l.b16 %v359
    %v727 = vunpack.c.h.b16 %v359
    %v728 = vunpack.c.l.b16 %v360
    %v729 = vunpack.c.l.b16 %v361
    %v730 = vunpack.c.h.b16 %v361
    %v731 = vunpack.c.l.b16 %v362
    %v732 = vunpack.c.h.b16 %v362
    %v733 = vunpack.c.l.b16 %v363
    %v734 = vunpack.c.h.b16 %v363
    %v735 = vunpack.c.l.b16 %v364
    %v736 = vunpack.c.l.b16 %v365
    %v737 = vunpack.c.h.b16 %v365
    %v738 = vunpack.c.l.b16 %v366
    %v739 = vunpack.c.h.b16 %v366
    %v740 = vunpack.c.l.b16 %v367
    %v741 = vunpack.c.h.b16 %v367
    %v742 = vunpack.c.l.b16 %v368
    %v743 = vunpack.c.l.b16 %v369
    %v744 = vunpack.c.h.b16 %v369
    %v745 = vunpack.c.l.b16 %v370
    %v746 = vunpack.c.h.b16 %v370
    %v747 = vunpack.c.l.b16 %v371
    %v748 = vunpack.c.h.b16 %v371
    %v749 = vunpack.c.l.b16 %v372
    %v750 = vunpack.c.l.b16 %v373
    %v751 = vunpack.c.h.b16 %v373
    %v752 = vunpack.c.l.b16 %v374
    %v753 = vunpack.c.h.b16 %v374
    %v754 = vunpack.c.l.b16 %v375
    %v755 = vunpack.c.h.b16 %v375
    %v756 = vunpack.c.l.b16 %v376
    %v757 = vunpack.c.l.b16 %v377
    %v758 = vunpack.c.h.b16 %v377
    %v759 = vunpack.c.l.b16 %v378
    %v760 = vunpack.c.h.b16 %v378
    %v761 = vunpack.c.l.b16 %v379
    %v762 = vunpack.c.h.b16 %v379
    %v763 = vunpack.c.l.b16 %v380
    %v764 = vunpack.c.l.b16 %v381
    %v765 = vunpack.c.h.b16 %v381
    %v766 = vunpack.c.l.b16 %v382
    %v767 = vunpack.c.h.b16 %v382
    %v768 = vunpack.c.l.b16 %v383
    %v769 = vunpack.c.h.b16 %v383
    %v770 = vunpack.c.l.b16 %v384
    %v771 = vunpack.c.l.b16 %v385
    %v772 = vunpack.c.h.b16 %v385
    %v773 = vunpack.c.l.b16 %v386
    %v774 = vunpack.c.h.b16 %v386
    %v775 = vunpack.c.l.b16 %v387
    %v776 = vunpack.c.h.b16 %v387
    %v777 = vunpack.c.l.b16 %v388
    %v778 = vpack.c.b16 %v561, %v554
    %v779 = vpack.c.b16 %v562, %v555
    %v780 = vpack.c.b16 %v563, %v556
    %v781 = vpack.c.b16 %v564, %v557
    %v782 = vpack.c.b16 %v565, %v558
    %v783 = vpack.c.b16 %v566, %v559
    %v784 = vpack.c.b16 %v567, %v560
    %v785 = vpack.c.b16 %v575, %v568
    %v786 = vpack.c.b16 %v576, %v569
    %v787 = vpack.c.b16 %v577, %v570
    %v788 = vpack.c.b16 %v578, %v571
    %v789 = vpack.c.b16 %v579, %v572
    %v790 = vpack.c.b16 %v580, %v573
    %v791 = vpack.c.b16 %v581, %v574
    %v792 = vpack.c.b16 %v589, %v582
    %v793 = vpack.c.b16 %v590, %v583
    %v794 = vpack.c.b16 %v591, %v584
    %v795 = vpack.c.b16 %v592, %v585
    %v796 = vpack.c.b16 %v593, %v586
    %v797 = vpack.c.b16 %v594, %v587
    %v798 = vpack.c.b16 %v595, %v588
    %v799 = vpack.c.b16 %v603, %v596
    %v800 = vpack.c.b16 %v604, %v597
    %v801 = vpack.c.b16 %v605, %v598
    %v802 = vpack.c.b16 %v606, %v599
    %v803 = vpack.c.b16 %v607, %v600
    %v804 = vpack.c.b16 %v608, %v601
    %v805 = vpack.c.b16 %v609, %v602
    %v806 = vpack.c.b16 %v617, %v610
    %v807 = vpack.c.b16 %v618, %v611
    %v808 = vpack.c.b16 %v619, %v612
    %v809 = vpack.c.b16 %v620, %v613
    %v810 = vpack.c.b16 %v621, %v614
    %v811 = vpack.c.b16 %v622, %v615
    %v812 = vpack.c.b16 %v623, %v616
    %v813 = vpack.c.b16 %v631, %v624
    %v814 = vpack.c.b16 %v632, %v625
    %v815 = vpack.c.b16 %v633, %v626
    %v816 = vpack.c.b16 %v634, %v627
    %v817 = vpack.c.b16 %v635, %v628
    %v818 = vpack.c.b16 %v636, %v629
    %v819 = vpack.c.b16 %v637, %v630
    %v820 = vpack.c.b16 %v645, %v638
    %v821 = vpack.c.b16 %v646, %v639
    %v822 = vpack.c.b16 %v647, %v640
    %v823 = vpack.c.b16 %v648, %v641
    %v824 = vpack.c.b16 %v649, %v642
    %v825 = vpack.c.b16 %v650, %v643
    %v826 = vpack.c.b16 %v651, %v644
    %v827 = vpack.c.b16 %v659, %v652
    %v828 = vpack.c.b16 %v660, %v653
    %v829 = vpack.c.b16 %v661, %v654
    %v830 = vpack.c.b16 %v662, %v655
    %v831 = vpack.c.b16 %v663, %v656
    %v832 = vpack.c.b16 %v664, %v657
    %v833 = vpack.c.b16 %v665, %v658
    %v834 = vpack.c.b16 %v673, %v666
    %v835 = vpack.c.b16 %v674, %v667
    %v836 = vpack.c.b16 %v675, %v668
    %v837 = vpack.c.b16 %v676, %v669
    %v838 = vpack.c.b16 %v677, %v670
    %v839 = vpack.c.b16 %v678, %v671
    %v840 = vpack.c.b16 %v679, %v672
    %v841 = vpack.c.b16 %v687, %v680
    %v842 = vpack.c.b16 %v688, %v681
    %v843 = vpack.c.b16 %v689, %v682
    %v844 = vpack.c.b16 %v690, %v683
    %v845 = vpack.c.b16 %v691, %v684
    %v846 = vpack.c.b16 %v692, %v685
    %v847 = vpack.c.b16 %v693, %v686
    %v848 = vpack.c.b16 %v701, %v694
    %v849 = vpack.c.b16 %v702, %v695
    %v850 = vpack.c.b16 %v703, %v696
    %v851 = vpack.c.b16 %v704, %v697
    %v852 = vpack.c.b16 %v705, %v698
    %v853 = vpack.c.b16 %v706, %v699
    %v854 = vpack.c.b16 %v707, %v700
    %v855 = vpack.c.b16 %v715, %v708
    %v856 = vpack.c.b16 %v716, %v709
    %v857 = vpack.c.b16 %v717, %v710
    %v858 = vpack.c.b16 %v718, %v711
    %v859 = vpack.c.b16 %v719, %v712
    %v860 = vpack.c.b16 %v720, %v713
    %v861 = vpack.c.b16 %v721, %v714
    %v862 = vpack.c.b16 %v729, %v722
    %v863 = vpack.c.b16 %v730, %v723
    %v864 = vpack.c.b16 %v731, %v724
    %v865 = vpack.c.b16 %v732, %v725
    %v866 = vpack.c.b16 %v733, %v726
    %v867 = vpack.c.b16 %v734, %v727
    %v868 = vpack.c.b16 %v735, %v728
    %v869 = vpack.c.b16 %v743, %v736
    %v870 = vpack.c.b16 %v744, %v737
    %v871 = vpack.c.b16 %v745, %v738
    %v872 = vpack.c.b16 %v746, %v739
    %v873 = vpack.c.b16 %v747, %v740
    %v874 = vpack.c.b16 %v748, %v741
    %v875 = vpack.c.b16 %v749, %v742
    %v876 = vpack.c.b16 %v757, %v750
    %v877 = vpack.c.b16 %v758, %v751
    %v878 = vpack.c.b16 %v759, %v752
    %v879 = vpack.c.b16 %v760, %v753
    %v880 = vpack.c.b16 %v761, %v754
    %v881 = vpack.c.b16 %v762, %v755
    %v882 = vpack.c.b16 %v763, %v756
    %v883 = vpack.c.b16 %v771, %v764
    %v884 = vpack.c.b16 %v772, %v765
    %v885 = vpack.c.b16 %v773, %v766
    %v886 = vpack.c.b16 %v774, %v767
    %v887 = vpack.c.b16 %v775, %v768
    %v888 = vpack.c.b16 %v776, %v769
    %v889 = vpack.c.b16 %v777, %v770
    %1002 = vmatprep.subr.bf16.mxu0 %v779
    %1003 = vmatpush1.bf16.msra.mxu0 %v778
    %1004 = vmatprep.subr.bf16.mxu0 %v786
    %1005 = vmatpush1.bf16.msra.mxu0 %v785
    %1006 = vmatprep.subr.bf16.mxu0 %v793
    %1007 = vmatpush1.bf16.msra.mxu0 %v792
    %1008 = vmatprep.subr.bf16.mxu0 %v800
    %1009 = vmatpush1.bf16.msra.mxu0 %v799
    %1010 = vmatprep.subr.bf16.mxu0 %v807
    %1011 = vmatpush1.bf16.msra.mxu0 %v806
    %1012 = vmatprep.subr.bf16.mxu0 %v814
    %1013 = vmatpush1.bf16.msra.mxu0 %v813
    %1014 = vmatprep.subr.bf16.mxu0 %v821
    %1015 = vmatpush1.bf16.msra.mxu0 %v820
    %1016 = vmatprep.subr.bf16.mxu0 %v828
    %1017 = vmatpush1.bf16.msra.mxu0 %v827
    %1018 = vmatprep.subr.bf16.mxu0 %v835
    %1019 = vmatpush1.bf16.msra.mxu0 %v834
    %1020 = vmatprep.subr.bf16.mxu0 %v842
    %1021 = vmatpush1.bf16.msra.mxu0 %v841
    %1022 = vmatprep.subr.bf16.mxu0 %v849
    %1023 = vmatpush1.bf16.msra.mxu0 %v848
    %1024 = vmatprep.subr.bf16.mxu0 %v856
    %1025 = vmatpush1.bf16.msra.mxu0 %v855
    %1026 = vmatprep.subr.bf16.mxu0 %v863
    %1027 = vmatpush1.bf16.msra.mxu0 %v862
    %1028 = vmatprep.subr.bf16.mxu0 %v870
    %1029 = vmatpush1.bf16.msra.mxu0 %v869
    %1030 = vmatprep.subr.bf16.mxu0 %v877
    %1031 = vmatpush1.bf16.msra.mxu0 %v876
    %1032 = vmatprep.subr.bf16.mxu0 %v884
    %1033 = vmatpush1.bf16.msra.mxu0 %v883
    %1034 = vmatprep.mubr.bf16.mxu0 %v260
    %1035 = vmatmul.mubr.bf16.gmra.mrb[0].mxu0 %v259
    %v1036 = vpop.f32.mrb[0].mxu0
    %v1037 = vadd.f32 %v394, %v1036
    %v1038 = vpop.f32.mrb[0].mxu0
    %v1039 = vadd.f32 %v398, %v1038
    %v1040 = vpop.f32.mrb[0].mxu0
    %v1041 = vpop.f32.mrb[0].mxu0
    %1042 = vdwg.mxu0
    %1043 = vmatprep.subr.bf16.mxu0 %v781
    %1044 = vmatpush1.bf16.msra.mxu0 %v780
    %1045 = vmatprep.subr.bf16.mxu0 %v788
    %1046 = vmatpush1.bf16.msra.mxu0 %v787
    %1047 = vmatprep.subr.bf16.mxu0 %v795
    %1048 = vmatpush1.bf16.msra.mxu0 %v794
    %1049 = vmatprep.subr.bf16.mxu0 %v802
    %1050 = vmatpush1.bf16.msra.mxu0 %v801
    %1051 = vmatprep.subr.bf16.mxu0 %v809
    %1052 = vmatpush1.bf16.msra.mxu0 %v808
    %1053 = vmatprep.subr.bf16.mxu0 %v816
    %1054 = vmatpush1.bf16.msra.mxu0 %v815
    %1055 = vmatprep.subr.bf16.mxu0 %v823
    %1056 = vmatpush1.bf16.msra.mxu0 %v822
    %1057 = vmatprep.subr.bf16.mxu0 %v830
    %1058 = vmatpush1.bf16.msra.mxu0 %v829
    %1059 = vmatprep.subr.bf16.mxu0 %v837
    %1060 = vmatpush1.bf16.msra.mxu0 %v836
    %1061 = vmatprep.subr.bf16.mxu0 %v844
    %1062 = vmatpush1.bf16.msra.mxu0 %v843
    %1063 = vmatprep.subr.bf16.mxu0 %v851
    %1064 = vmatpush1.bf16.msra.mxu0 %v850
    %1065 = vmatprep.subr.bf16.mxu0 %v858
    %1066 = vmatpush1.bf16.msra.mxu0 %v857
    %1067 = vmatprep.subr.bf16.mxu0 %v865
    %1068 = vmatpush1.bf16.msra.mxu0 %v864
    %1069 = vmatprep.subr.bf16.mxu0 %v872
    %1070 = vmatpush1.bf16.msra.mxu0 %v871
    %1071 = vmatprep.subr.bf16.mxu0 %v879
    %1072 = vmatpush1.bf16.msra.mxu0 %v878
    %1073 = vmatprep.subr.bf16.mxu0 %v886
    %1074 = vmatpush1.bf16.msra.mxu0 %v885
    %1075 = vmatprep.mubr.bf16.mxu0 %v260
    %1076 = vmatmul.mubr.bf16.gmra.mrb[0].mxu0 %v259
    %v1077 = vpop.f32.mrb[0].mxu0
    %v1078 = vadd.f32 %v402, %v1077
    %v1079 = vpop.f32.mrb[0].mxu0
    %v1080 = vadd.f32 %v406, %v1079
    %v1081 = vpop.f32.mrb[0].mxu0
    %v1082 = vpop.f32.mrb[0].mxu0
    %1083 = vdwg.mxu0
    %1084 = vmatprep.subr.bf16.mxu0 %v783
    %1085 = vmatpush1.bf16.msra.mxu0 %v782
    %1086 = vmatprep.subr.bf16.mxu0 %v790
    %1087 = vmatpush1.bf16.msra.mxu0 %v789
    %1088 = vmatprep.subr.bf16.mxu0 %v797
    %1089 = vmatpush1.bf16.msra.mxu0 %v796
    %1090 = vmatprep.subr.bf16.mxu0 %v804
    %1091 = vmatpush1.bf16.msra.mxu0 %v803
    %1092 = vmatprep.subr.bf16.mxu0 %v811
    %1093 = vmatpush1.bf16.msra.mxu0 %v810
    %1094 = vmatprep.subr.bf16.mxu0 %v818
    %1095 = vmatpush1.bf16.msra.mxu0 %v817
    %1096 = vmatprep.subr.bf16.mxu0 %v825
    %1097 = vmatpush1.bf16.msra.mxu0 %v824
    %1098 = vmatprep.subr.bf16.mxu0 %v832
    %1099 = vmatpush1.bf16.msra.mxu0 %v831
    %1100 = vmatprep.subr.bf16.mxu0 %v839
    %1101 = vmatpush1.bf16.msra.mxu0 %v838
    %1102 = vmatprep.subr.bf16.mxu0 %v846
    %1103 = vmatpush1.bf16.msra.mxu0 %v845
    %1104 = vmatprep.subr.bf16.mxu0 %v853
    %1105 = vmatpush1.bf16.msra.mxu0 %v852
    %1106 = vmatprep.subr.bf16.mxu0 %v860
    %1107 = vmatpush1.bf16.msra.mxu0 %v859
    %1108 = vmatprep.subr.bf16.mxu0 %v867
    %1109 = vmatpush1.bf16.msra.mxu0 %v866
    %1110 = vmatprep.subr.bf16.mxu0 %v874
    %1111 = vmatpush1.bf16.msra.mxu0 %v873
    %1112 = vmatprep.subr.bf16.mxu0 %v881
    %1113 = vmatpush1.bf16.msra.mxu0 %v880
    %1114 = vmatprep.subr.bf16.mxu0 %v888
    %1115 = vmatpush1.bf16.msra.mxu0 %v887
    %1116 = vmatprep.mubr.bf16.mxu0 %v260
    %1117 = vmatmul.mubr.bf16.gmra.mrb[0].mxu0 %v259
    %v1118 = vpop.f32.mrb[0].mxu0
    %v1119 = vadd.f32 %v410, %v1118
    %v1120 = vpop.f32.mrb[0].mxu0
    %v1121 = vadd.f32 %v414, %v1120
    %v1122 = vpop.f32.mrb[0].mxu0
    %v1123 = vpop.f32.mrb[0].mxu0
    %1124 = vdwg.mxu0
    %1125 = vmatprep.subr.bf16.mxu0 0
    %1126 = vmatpush1.bf16.msra.mxu0 %v784
    %1127 = vmatprep.subr.bf16.mxu0 0
    %1128 = vmatpush1.bf16.msra.mxu0 %v791
    %1129 = vmatprep.subr.bf16.mxu0 0
    %1130 = vmatpush1.bf16.msra.mxu0 %v798
    %1131 = vmatprep.subr.bf16.mxu0 0
    %1132 = vmatpush1.bf16.msra.mxu0 %v805
    %1133 = vmatprep.subr.bf16.mxu0 0
    %1134 = vmatpush1.bf16.msra.mxu0 %v812
    %1135 = vmatprep.subr.bf16.mxu0 0
    %1136 = vmatpush1.bf16.msra.mxu0 %v819
    %1137 = vmatprep.subr.bf16.mxu0 0
    %1138 = vmatpush1.bf16.msra.mxu0 %v826
    %1139 = vmatprep.subr.bf16.mxu0 0
    %1140 = vmatpush1.bf16.msra.mxu0 %v833
    %1141 = vmatprep.subr.bf16.mxu0 0
    %1142 = vmatpush1.bf16.msra.mxu0 %v840
    %1143 = vmatprep.subr.bf16.mxu0 0
    %1144 = vmatpush1.bf16.msra.mxu0 %v847
    %1145 = vmatprep.subr.bf16.mxu0 0
    %1146 = vmatpush1.bf16.msra.mxu0 %v854
    %1147 = vmatprep.subr.bf16.mxu0 0
    %1148 = vmatpush1.bf16.msra.mxu0 %v861
    %1149 = vmatprep.subr.bf16.mxu0 0
    %1150 = vmatpush1.bf16.msra.mxu0 %v868
    %1151 = vmatprep.subr.bf16.mxu0 0
    %1152 = vmatpush1.bf16.msra.mxu0 %v875
    %1153 = vmatprep.subr.bf16.mxu0 0
    %1154 = vmatpush1.bf16.msra.mxu0 %v882
    %1155 = vmatprep.subr.bf16.mxu0 0
    %1156 = vmatpush1.bf16.msra.mxu0 %v889
    %1157 = vmatprep.mubr.bf16.mxu0 %v260
    %1158 = vmatmul.mubr.bf16.gmra.mrb[0].mxu0 %v259
    %v1159 = vpop.f32.mrb[0].mxu0
    %v1160 = vadd.f32 %v418, %v1159
    %v1161 = vpop.f32.mrb[0].mxu0
    %v1162 = vpop.f32.mrb[0].mxu0
    %v1163 = vpop.f32.mrb[0].mxu0
    %1164 = vdwg.mxu0
    %v1165 = vsub.f32 0.0, %v1037
    %v1166 = vsub.f32 0.0, %v1039
    %v1167 = vsub.f32 0.0, %v1078
    %v1168 = vsub.f32 0.0, %v1080
    %v1169 = vsub.f32 0.0, %v1119
    %v1170 = vsub.f32 0.0, %v1121
    %v1171 = vsub.f32 0.0, %v1160
    %v1172 = vmul.f32 %v1165, 1.442695
    %v1173 = vpow.pop %v1172
    %v1174 = vmul.f32 %v1166, 1.442695
    %v1175 = vpow.pop %v1174
    %v1176 = vmul.f32 %v1167, 1.442695
    %v1177 = vpow.pop %v1176
    %v1178 = vmul.f32 %v1168, 1.442695
    %v1179 = vpow.pop %v1178
    %v1180 = vmul.f32 %v1169, 1.442695
    %v1181 = vpow.pop %v1180
    %v1182 = vmul.f32 %v1170, 1.442695
    %v1183 = vpow.pop %v1182
    %v1184 = vmul.f32 %v1171, 1.442695
    %v1185 = vpow.pop %v1184
    %v1186 = vadd.f32 %v1173, 1.0
    %v1187 = vadd.f32 %v1175, 1.0
    %v1188 = vadd.f32 %v1177, 1.0
    %v1189 = vadd.f32 %v1179, 1.0
    %v1190 = vadd.f32 %v1181, 1.0
    %v1191 = vadd.f32 %v1183, 1.0
    %v1192 = vadd.f32 %v1185, 1.0
    %v1193 = vrcp.pop %v1186
    %v1194 = vrcp.pop %v1187
    %v1195 = vrcp.pop %v1188
    %v1196 = vrcp.pop %v1189
    %v1197 = vrcp.pop %v1190
    %v1198 = vrcp.pop %v1191
    %v1199 = vrcp.pop %v1192
    %1200 = vst [vmem:[#allocation10] sm:$0xff] %v1193
    %1201 = vst [vmem:[#allocation10 + $0x8] sm:$0xff] %v1194
    %1202 = vst [vmem:[#allocation10 + $0x10] sm:$0xff] %v1195
    %1203 = vst [vmem:[#allocation10 + $0x18] sm:$0xff] %v1196
    %1204 = vst [vmem:[#allocation10 + $0x20] sm:$0xff] %v1197
    %1205 = vst [vmem:[#allocation10 + $0x28] sm:$0xff] %v1198
    %1206 = vst [vmem:[#allocation10 + $0x30] sm:$0xff] %v1199
    // Predicated region
    $region46: #{tpu_custom_call.1} parent=1 // pred_check
      _
    $region47: #{tpu_custom_call.1} parent=1 // pred_check_branch
      %1208 = sbr.rel (0) target = $region49
    $region48: #{tpu_custom_call.1} parent=1 // pred_region
      %s1210 = ssub.s32 896, 896
      %1211 = vsyncadd [#allocation4], %s1210
      %s1213 = sshll.u32 [#allocation10], 4
      %s1214 = int_to_ptr.vmem [resolvable:$true] %s1213
      %1216 = dma.vmem_to_hbm [thread:$0]  %s1214, 896, %s7, [#allocation4]
    $region49: #{tpu_custom_call.1} parent=1 // pred_fallthru
      _
    // Predicated region
    $region50: #{tpu_custom_call.1} parent=1 // pred_check
      _
    $region51: #{tpu_custom_call.1} parent=1 // pred_check_branch
      %1218 = sbr.rel (0) target = $region53
    $region52: #{tpu_custom_call.1} parent=1 // pred_region
      %1219 = dma.done [#allocation4], 896
    $region53: #{tpu_custom_call.1} parent=1 // pred_fallthru
      _
    %1220 = vsyncpa [#allocation3], 1
    %1221 = vsyncpa [#allocation6], 1
    %1222 = vsyncpa [#allocation9], 1
    %1223 = vsyncpa [#allocation4], 1

</llo_original>
